<compile_context>
chip_gen: v6e
topology: v6e:2x2x1
jax: 0.10.0
libtpu: 0.0.40
codegen_flags: <defaults>
</compile_context>

<pallas_src>
import functools
import math

import jax
import jax.numpy as jnp
from jax import lax
from jax.experimental import pallas as pl
from jax.experimental.pallas import tpu as pltpu

# ArcFace hyper-parameters (same as the PyTorch module defaults).
S_SCALE = 64.0
M_MARGIN = 0.5
EPS = 1e-4

COS_M = math.cos(M_MARGIN)
SIN_M = math.sin(M_MARGIN)
# theta + m > pi - eps  <=>  cosine < cos(pi - eps - m); clipped value is cos(pi - eps).
THRESH = math.cos(math.pi - EPS - M_MARGIN)
CLIP_VAL = math.cos(math.pi - EPS)

# The closed-form epilogue is exact vs. the reference only under these
# conditions (see header comment).  Assert them so a silent divergence cannot
# happen if someone edits the constants.
assert 0.0 < M_MARGIN and (M_MARGIN + EPS) < math.pi and EPS < math.pi / 4


def _round_up(x, mult):
    return ((x + mult - 1) // mult) * mult


def _arcface_kernel(emb_ref, w_ref, label_ref, out_ref, inv_norm_ref, *,
                    tm, tn, emb_resident):
    # emb_ref:      (B_pad, E) or (tm, E)   storage dtype (bf16 or f32)
    # w_ref:        (E, tn)                 storage dtype
    # label_ref:    (B_pad, 1) or (tm, 1)   int32
    # out_ref:      (tm, tn)                out dtype
    # inv_norm_ref: (1, tn)  f32 VMEM scratch, persists across grid steps
    j = pl.program_id(0)   # class tile (outer, megacore-parallel)
    i = pl.program_id(1)   # batch tile (inner, "arbitrary")

    # Per-column 1/||w||: batch-invariant, so compute once per class tile.
    @pl.when(i == 0)
    def _():
        w = w_ref[...].astype(jnp.float32)
        # +1e-30 only guards the all-zero-column case (e.g. padded class
        # columns); the reference would produce NaN there.
        inv_norm_ref[...] = lax.rsqrt(
            jnp.sum(w * w, axis=0, keepdims=True) + 1e-30)

    if emb_resident:
        row0 = pl.multiple_of(i * tm, tm)
        emb = emb_ref[pl.ds(row0, tm), :]
        lbl = label_ref[pl.ds(row0, tm), :]
    else:
        emb = emb_ref[...]
        lbl = label_ref[...]

    # cosine = emb @ (w / ||w||) == (emb @ w) * (1/||w||)  (per-column scale).
    cosine = jnp.dot(emb, w_ref[...], preferred_element_type=jnp.float32)
    cosine = cosine * inv_norm_ref[...]
    cosine = jnp.clip(cosine, -1.0 + EPS, 1.0 - EPS)

    # Label mask for this (batch tile, class tile): compare against the
    # tile-local label (cheap (tm,1) subtract) instead of global column ids.
    label_local = lbl - j * tn                                   # (tm, 1) i32
    col_ids = lax.broadcasted_iota(jnp.int32, cosine.shape, 1)   # (tm, tn)
    is_label = col_ids == label_local

    # Exact epilogue without arccos/cos:
    #  - non-label columns: clip(theta, eps, pi-eps) is inert -> cos(theta) == cosine
    #  - label columns:     cos(theta + m) = c*cos(m) - sqrt(1-c^2)*sin(m),
    #                       clipped to cos(pi - eps) when cosine < THRESH.
    # 1 - c^2 >= 2e-4 because of the clamp, so no max(…, 0) guard is needed.
    sin_theta = jnp.sqrt(1.0 - cosine * cosine)
    phi = cosine * COS_M - sin_theta * SIN_M
    phi = jnp.where(cosine < THRESH, CLIP_VAL, phi)
    out_ref[...] = (jnp.where(is_label, phi, cosine) * S_SCALE).astype(
        out_ref.dtype)


def arcface_forward(embeddings, weight, label, norms=None, z_pose=None, *,
                    tm=256, tn=2048, mxu_dtype=jnp.bfloat16,
                    out_dtype=jnp.float32,
                    resident_emb_max_bytes=4 * 1024 * 1024):
    """ArcFace forward. `norms` and `z_pose` are accepted but unused, exactly
    like the PyTorch module's forward (which never reads them)."""
    del norms, z_pose
    B, E = embeddings.shape
    E2, C = weight.shape
    assert E == E2

    storage_dtype = jnp.dtype(mxu_dtype)
    embeddings = embeddings.astype(storage_dtype)
    weight = weight.astype(storage_dtype)
    label2d = label.astype(jnp.int32).reshape(B, 1)

    # ---- tile selection + zero padding for ragged B / C ----
    tm_eff = min(tm, _round_up(B, 8))
    b_pad = _round_up(B, tm_eff)
    tn_eff = min(tn, _round_up(C, 128))
    c_pad = _round_up(C, tn_eff)

    if b_pad != B:
        embeddings = jnp.pad(embeddings, ((0, b_pad - B), (0, 0)))
        label2d = jnp.pad(label2d, ((0, b_pad - B), (0, 0)))
    if c_pad != C:
        weight = jnp.pad(weight, ((0, 0), (0, c_pad - C)))

    class_steps = c_pad // tn_eff
    batch_steps = b_pad // tm_eff

    # ---- embeddings/labels VMEM residency (fetch once per core) ----
    emb_resident = (b_pad * E * storage_dtype.itemsize
                    <= resident_emb_max_bytes)
    if emb_resident:
        emb_spec = pl.BlockSpec((b_pad, E), lambda j, i: (0, 0))
        lbl_spec = pl.BlockSpec((b_pad, 1), lambda j, i: (0, 0))
    else:
        emb_spec = pl.BlockSpec((tm_eff, E), lambda j, i: (i, 0))
        lbl_spec = pl.BlockSpec((tm_eff, 1), lambda j, i: (i, 0))

    # ---- weight spec: deeper buffering when every step needs a fresh tile ----
    w_map = lambda j, i: (0, j)
    deep_w = (batch_steps == 1) and (class_steps >= 3)
    if deep_w:
        try:
            w_spec = pl.BlockSpec((E, tn_eff), w_map,
                                  pipeline_mode=pl.Buffered(3))
        except TypeError:  # jax build without pipeline_mode kwarg
            w_spec = pl.BlockSpec((E, tn_eff), w_map)
    else:
        w_spec = pl.BlockSpec((E, tn_eff), w_map)

    kernel = functools.partial(_arcface_kernel, tm=tm_eff, tn=tn_eff,
                               emb_resident=emb_resident)

    # ---- VMEM budget: derive cap from physical VMEM (v7x-safe) ----
    out_itemsize = jnp.dtype(out_dtype).itemsize
    w_bufs = 3 if deep_w else 2
    block_bytes = (
        (b_pad * E if emb_resident else 2 * tm_eff * E) * storage_dtype.itemsize
        + w_bufs * E * tn_eff * storage_dtype.itemsize
        + 2 * tm_eff * tn_eff * out_itemsize
        + (b_pad if emb_resident else 2 * tm_eff) * 4
        + tn_eff * 4)
    try:
        phys_vmem = pltpu.get_tpu_info().vmem_capacity_bytes
    except Exception:
        phys_vmem = 64 * 1024 * 1024   # conservative (v7x per-TC)
    vmem_cap = int(phys_vmem * 0.8)
    vmem_limit = int(min(max(2 * block_bytes, 32 * 1024 * 1024), vmem_cap))

    out_padded = pl.pallas_call(
        kernel,
        out_shape=jax.ShapeDtypeStruct((b_pad, c_pad), out_dtype),
        grid_spec=pltpu.PrefetchScalarGridSpec(
            num_scalar_prefetch=0,
            # Classes OUTER, batch INNER: weight tile is inner-loop invariant.
            grid=(class_steps, batch_steps),
            in_specs=[emb_spec, w_spec, lbl_spec],
            out_specs=pl.BlockSpec((tm_eff, tn_eff), lambda j, i: (i, j)),
            scratch_shapes=[pltpu.VMEM((1, tn_eff), jnp.float32)],
        ),
        compiler_params=pltpu.CompilerParams(
            # Class axis parallel (megacore-sharded; many tiles for real
            # classnum); batch axis arbitrary because the inv-norm scratch is
            # carried across it.
            dimension_semantics=("parallel", "arbitrary"),
            vmem_limit_bytes=vmem_limit,
        ),
    )(embeddings, weight, label2d)

    if b_pad != B or c_pad != C:
        out_padded = out_padded[:B, :C]
    return out_padded


def arcface_reference(embeddings, weight, label):
    """Pure-JAX reference (mirrors the PyTorch forward exactly)."""
    col_norm = jnp.linalg.norm(weight, axis=0, keepdims=True)
    w_n = weight / col_norm
    cosine = jnp.dot(embeddings, w_n, precision=lax.Precision.HIGHEST)
    cosine = jnp.clip(cosine, -1.0 + EPS, 1.0 - EPS)
    m_hot = jnp.zeros_like(cosine).at[
        jnp.arange(label.shape[0]), label].set(M_MARGIN)
    theta = jnp.arccos(cosine)
    theta_m = jnp.clip(theta + m_hot, EPS, math.pi - EPS)
    return jnp.cos(theta_m) * S_SCALE


if __name__ == "__main__":
    # Small shapes consistent with the module: embedding_size, classnum, batch.
    B, E, C = 16, 32, 512

    key = jax.random.PRNGKey(0)
    k_emb, k_w, k_lbl = jax.random.split(key, 3)

    # uniform(-1, 1) init like the PyTorch module (the renorm/mul in __init__
    # is irrelevant after the per-column L2 norm done in the forward pass).
    weight = jax.random.uniform(k_w, (E, C), jnp.float32, -1.0, 1.0)

    emb = jax.random.normal(k_emb, (B, E), jnp.float32)
    emb = emb / jnp.linalg.norm(emb, axis=1, keepdims=True)

    label = jax.random.randint(k_lbl, (B,), 0, C, jnp.int32)
    norms = jnp.linalg.norm(emb, axis=1, keepdims=True)  # unused by forward

    ref = arcface_reference(emb, weight, label)

    # 1) Performance defaults: bf16-stored operands, big (auto-clamped) tiles,
    #    resident embeddings.  Tolerance sized for bf16 inputs at s=64 scale.
    out = jax.block_until_ready(arcface_forward(emb, weight, label, norms))
    assert out.shape == (B, C) and out.dtype == jnp.float32
    assert jnp.allclose(out, ref, atol=0.5), "bf16-path mismatch vs reference"

    # 2) Tight f32 check with tm=B, tn=128: multi-step class axis (scratch
    #    reuse, local-label offsets) and the deep-buffered weight path.
    out32 = jax.block_until_ready(
        arcface_forward(emb, weight, label, norms,
                        tm=16, tn=128, mxu_dtype=jnp.float32))
    assert jnp.allclose(out32, ref, atol=2e-3, rtol=2e-3), "f32-path mismatch"

    # 3) Ragged shapes (B, C not tile multiples): exercises zero-padding plus
    #    the in-kernel dynamic batch slice of the resident embeddings.
    B2, C2 = 12, 300
    emb2, w2 = emb[:B2], weight[:, :C2]
    lbl2 = jnp.clip(label[:B2], 0, C2 - 1)
    ref2 = arcface_reference(emb2, w2, lbl2)
    out2 = jax.block_until_ready(
        arcface_forward(emb2, w2, lbl2, tm=8, tn=128, mxu_dtype=jnp.float32))
    assert out2.shape == (B2, C2)
    assert jnp.allclose(out2, ref2, atol=2e-3, rtol=2e-3), "ragged-path mismatch"

    print("KERNEL_OK")
</pallas_src>

<mosaic_0001>
module attributes {stable_mosaic.version = 11 : i64} {
  func.func @_arcface_kernel(%arg0: i32, %arg1: i32, %arg2: memref<16x32xbf16, #tpu.memory_space<vmem>>, %arg3: memref<32x512xbf16, #tpu.memory_space<vmem>>, %arg4: memref<16x1xi32, #tpu.memory_space<vmem>>, %arg5: memref<16x512xf32, #tpu.memory_space<vmem>>, %arg6: memref<1x512xf32, #tpu.memory_space<vmem>>) attributes {dimension_semantics = [#tpu.dimension_semantics<parallel>, #tpu.dimension_semantics<arbitrary>], iteration_bounds = array<i64: 1, 1>, scalar_prefetch = 0 : i64, scratch_operands = 1 : i64, tpu.core_type = #tpu.core_type<tc>, window_params = [{pipeline_mode = #tpu.pipeline_mode<synchronous>, transform_indices = @transform_0, window_bounds = array<i64: 16, 32>}, {transform_indices = @transform_1, window_bounds = array<i64: 32, 512>}, {pipeline_mode = #tpu.pipeline_mode<synchronous>, transform_indices = @transform_2, window_bounds = array<i64: 16, 1>}, {transform_indices = @transform_3, window_bounds = array<i64: 16, 512>}]} {
    %c0_i32 = arith.constant 0 : i32
    %0 = arith.cmpi eq, %arg1, %c0_i32 : i32
    %1 = arith.extui %0 : i1 to i32
    %c0_i32_0 = arith.constant 0 : i32
    %2 = arith.cmpi ne, %1, %c0_i32_0 : i32
    scf.if %2 {
      %c0_16 = arith.constant 0 : index
      %c0_17 = arith.constant 0 : index
      %41 = vector.load %arg3[%c0_16, %c0_17] : memref<32x512xbf16, #tpu.memory_space<vmem>>, vector<32x512xbf16>
      %42 = arith.extf %41 : vector<32x512xbf16> to vector<32x512xf32>
      %43 = arith.mulf %42, %42 : vector<32x512xf32>
      %cst_18 = arith.constant dense<0.000000e+00> : vector<512xf32>
      %44 = vector.multi_reduction <add>, %43, %cst_18 [0] : vector<32x512xf32> to vector<512xf32>
      %45 = vector.shape_cast %44 : vector<512xf32> to vector<1x512xf32>
      %cst_19 = arith.constant 1.000000e-30 : f32
      %46 = vector.broadcast %cst_19 : f32 to vector<1x512xf32>
      %47 = arith.addf %45, %46 : vector<1x512xf32>
      %48 = math.rsqrt %47 : vector<1x512xf32>
      %c0_20 = arith.constant 0 : index
      %c0_21 = arith.constant 0 : index
      %49 = vector.load %arg6[%c0_20, %c0_21] : memref<1x512xf32, #tpu.memory_space<vmem>>, vector<1x512xf32>
      tpu.vector_store %arg6[%c0_20, %c0_21], %48 {strides = array<i32>} : memref<1x512xf32, #tpu.memory_space<vmem>>, vector<1x512xf32>,
    } else {
    }
    %c16_i32 = arith.constant 16 : i32
    %3 = arith.muli %arg1, %c16_i32 : i32
    %4 = tpu.assume_multiple %3, 16 : i32
    %5 = arith.index_cast %4 : i32 to index
    %c0 = arith.constant 0 : index
    %6 = vector.load %arg2[%5, %c0] : memref<16x32xbf16, #tpu.memory_space<vmem>>, vector<16x32xbf16>
    %7 = arith.index_cast %4 : i32 to index
    %c0_1 = arith.constant 0 : index
    %8 = vector.load %arg4[%7, %c0_1] : memref<16x1xi32, #tpu.memory_space<vmem>>, vector<16x1xi32>
    %c0_2 = arith.constant 0 : index
    %c0_3 = arith.constant 0 : index
    %9 = vector.load %arg3[%c0_2, %c0_3] : memref<32x512xbf16, #tpu.memory_space<vmem>>, vector<32x512xbf16>
    %cst = arith.constant dense<0.000000e+00> : vector<16x512xf32>
    %10 = tpu.matmul %6, %9, %cst {dimension_numbers = #tpu.dot_dimension_numbers<[1], [0], [0], [1], [0, 0, 1, 1], [], []>} : vector<16x32xbf16>, vector<32x512xbf16>, vector<16x512xf32> -> vector<16x512xf32>
    %c0_4 = arith.constant 0 : index
    %c0_5 = arith.constant 0 : index
    %11 = vector.load %arg6[%c0_4, %c0_5] : memref<1x512xf32, #tpu.memory_space<vmem>>, vector<1x512xf32>
    %12 = vector.broadcast %11 : vector<1x512xf32> to vector<16x512xf32>
    %13 = arith.mulf %10, %12 : vector<16x512xf32>
    %cst_6 = arith.constant -0.999899983 : f32
    %cst_7 = arith.constant 0.999899983 : f32
    %14 = vector.broadcast %cst_6 : f32 to vector<16x512xf32>
    %15 = arith.maximumf %14, %13 : vector<16x512xf32>
    %16 = vector.broadcast %cst_7 : f32 to vector<16x512xf32>
    %17 = arith.minimumf %16, %15 : vector<16x512xf32>
    %c512_i32 = arith.constant 512 : i32
    %18 = arith.muli %arg0, %c512_i32 : i32
    %19 = vector.broadcast %18 : i32 to vector<16x1xi32>
    %20 = arith.subi %8, %19 : vector<16x1xi32>
    %21 = tpu.iota {dimensions = array<i32: 1>} : vector<16x512xi32>
    %22 = vector.broadcast %20 : vector<16x1xi32> to vector<16x512xi32>
    %23 = arith.cmpi eq, %21, %22 : vector<16x512xi32>
    %24 = arith.mulf %17, %17 : vector<16x512xf32>
    %cst_8 = arith.constant 1.000000e+00 : f32
    %25 = vector.broadcast %cst_8 : f32 to vector<16x512xf32>
    %26 = arith.subf %25, %24 : vector<16x512xf32>
    %27 = math.sqrt %26 : vector<16x512xf32>
    %cst_9 = arith.constant 0.87758255 : f32
    %28 = vector.broadcast %cst_9 : f32 to vector<16x512xf32>
    %29 = arith.mulf %17, %28 : vector<16x512xf32>
    %cst_10 = arith.constant 0.47942555 : f32
    %30 = vector.broadcast %cst_10 : f32 to vector<16x512xf32>
    %31 = arith.mulf %27, %30 : vector<16x512xf32>
    %32 = arith.subf %29, %31 : vector<16x512xf32>
    %cst_11 = arith.constant -0.877534628 : f32
    %33 = vector.broadcast %cst_11 : f32 to vector<16x512xf32>
    %34 = arith.cmpf olt, %17, %33 : vector<16x512xf32>
    %cst_12 = arith.constant -1.000000e+00 : f32
    %35 = vector.broadcast %cst_12 : f32 to vector<16x512xf32>
    %36 = arith.select %34, %35, %32 : vector<16x512xi1>, vector<16x512xf32>
    %37 = arith.select %23, %36, %17 : vector<16x512xi1>, vector<16x512xf32>
    %cst_13 = arith.constant 6.400000e+01 : f32
    %38 = vector.broadcast %cst_13 : f32 to vector<16x512xf32>
    %39 = arith.mulf %37, %38 : vector<16x512xf32>
    %c0_14 = arith.constant 0 : index
    %c0_15 = arith.constant 0 : index
    %40 = vector.load %arg5[%c0_14, %c0_15] : memref<16x512xf32, #tpu.memory_space<vmem>>, vector<16x512xf32>
    tpu.vector_store %arg5[%c0_14, %c0_15], %39 {strides = array<i32>} : memref<16x512xf32, #tpu.memory_space<vmem>>, vector<16x512xf32>,
    return
  }
  func.func @transform_0(%arg0: i32, %arg1: i32) -> (i32, i32) {
    %c0_i32 = arith.constant 0 : i32
    %c0_i32_0 = arith.constant 0 : i32
    %c0_i32_1 = arith.constant 0 : i32
    return %c0_i32, %c0_i32_0 : i32, i32
  }
  func.func @transform_1(%arg0: i32, %arg1: i32) -> (i32, i32) {
    %c0_i32 = arith.constant 0 : i32
    %c0_i32_0 = arith.constant 0 : i32
    return %c0_i32, %arg0 : i32, i32
  }
  func.func @transform_2(%arg0: i32, %arg1: i32) -> (i32, i32) {
    %c0_i32 = arith.constant 0 : i32
    %c0_i32_0 = arith.constant 0 : i32
    %c0_i32_1 = arith.constant 0 : i32
    return %c0_i32, %c0_i32_0 : i32, i32
  }
  func.func @transform_3(%arg0: i32, %arg1: i32) -> (i32, i32) {
    %c0_i32 = arith.constant 0 : i32
    return %arg1, %arg0 : i32, i32
  }
}

</mosaic_0001>

<llo_original>
// kernel: tpu_custom_call.1
$region0: #{tpu_custom_call.1}
  #allocation0 [shape = 'u32[]', space=smem, size = 0x4, offset = 0x4, fixed_abs, tag = 'smem constant byte address 0x4 - core index']
  #allocation1 [shape = 'u32[144,128]{1,0:T(1,128)}', space=vmem, size = 0x12000, scoped, tag = 'internal scratch']
  #allocation2 [shape = 'f32[1,512]{1,0:T(1,128)}', space=vmem, size = 0x800, scoped, tag = 'scratch operand']
  %s0 = inlined_call_operand.vmem [shape: bf16[16,32], index: 0, kind: input, shape index: {}]
  %s1 = inlined_call_operand.hbm [shape: bf16[32,512], index: 1, kind: input, shape index: {}]
  %s2 = inlined_call_operand.vmem [shape: s32[16,1], index: 2, kind: input, shape index: {}]
  %s3 = inlined_call_operand.hbm [shape: f32[16,512], index: 3, kind: output, shape index: {}]
  %s4 = sld [smem:[#allocation0]]
  $region30: #{tpu_custom_call.1} parent=0
    _
  %s6 = ssub.s32 1, %s4
  %s7 = scalar_select 0, %s6, %s4
  $region1: #{tpu_custom_call.1} parent=0
    #allocation3 [shape = 'u8[32768]{0}', space=vmem, size = 0x8000, scoped, tag = 'input window, operand 1, single buffered']
    #allocation4 [shape = 's32[1]{0}', space=sflag, size = 0x4, scoped, tag = 'scoped memory for tpu_custom_call.1']
    #allocation5 [shape = 's32[1]{0}', space=sflag, size = 0x4, scoped, tag = 'scoped memory for tpu_custom_call.1']
    #allocation6 [shape = 'u8[32768]{0}', space=vmem, size = 0x8000, scoped, tag = 'output window, operand 0, single buffered']
    %8 = vsyncpa [#allocation4], 0
    %9 = vsyncpa [#allocation5], 0
    // Predicated region
    $region2: #{tpu_custom_call.1} parent=1 // pred_check
      _
    $region3: #{tpu_custom_call.1} parent=1 // pred_check_branch
      %11 = sbr.rel (0) target = $region5
    $region4: #{tpu_custom_call.1} parent=1 // pred_region
      _
    $region5: #{tpu_custom_call.1} parent=1 // pred_fallthru
      _
    // Predicated region
    $region6: #{tpu_custom_call.1} parent=1 // pred_check
      _
    $region7: #{tpu_custom_call.1} parent=1 // pred_check_branch
      %13 = sbr.rel (0) target = $region9
    $region8: #{tpu_custom_call.1} parent=1 // pred_region
      %s15 = ssub.s32 1024, 1024
      %16 = vsyncadd [#allocation4], %s15
      %s17 = sshll.u32 [#allocation3], 4
      %s18 = int_to_ptr.vmem [resolvable:$true] %s17
      %23 = dma.hbm_to_vmem [thread:$0]  %s1, 1024, %s18, [#allocation4], 256, 256, 16
    $region9: #{tpu_custom_call.1} parent=1 // pred_fallthru
      _
    // Predicated region
    $region10: #{tpu_custom_call.1} parent=1 // pred_check
      _
    $region11: #{tpu_custom_call.1} parent=1 // pred_check_branch
      %25 = sbr.rel (0) target = $region13
    $region12: #{tpu_custom_call.1} parent=1 // pred_region
      _
    $region13: #{tpu_custom_call.1} parent=1 // pred_fallthru
      _
    // Predicated region
    $region14: #{tpu_custom_call.1} parent=1 // pred_check
      _
    $region15: #{tpu_custom_call.1} parent=1 // pred_check_branch
      %27 = sbr.rel (0) target = $region17
    $region16: #{tpu_custom_call.1} parent=1 // pred_region
      %28 = dma.done [#allocation4], 1024
    $region17: #{tpu_custom_call.1} parent=1 // pred_fallthru
      _
    %p30 = scmp.eq.s32.totalorder 0, 0
    // Predicated region
    $region18: #{tpu_custom_call.1} parent=1 // pred_check
      %p31 = pneg %p30
    $region19: #{tpu_custom_call.1} parent=1 // pred_check_branch
      %33 = sbr.rel (%p31) target = $region21
    $region20: #{tpu_custom_call.1} parent=1 // pred_region
      %v34 = vld [vmem:[#allocation3] sm:$0xff]
      %v35 = vld [vmem:[#allocation3 + $0x8] sm:$0xff]
      %v36 = vld [vmem:[#allocation3 + $0x10] sm:$0xff]
      %v37 = vld [vmem:[#allocation3 + $0x18] sm:$0xff]
      %v38 = vld [vmem:[#allocation3 + $0x20] sm:$0xff]
      %v39 = vld [vmem:[#allocation3 + $0x28] sm:$0xff]
      %v40 = vld [vmem:[#allocation3 + $0x30] sm:$0xff]
      %v41 = vld [vmem:[#allocation3 + $0x38] sm:$0xff]
      %v42 = vunpack.c.l.bf16 %v34
      %v43 = vunpack.c.h.bf16 %v34
      %v44 = vunpack.c.l.bf16 %v35
      %v45 = vunpack.c.h.bf16 %v35
      %v46 = vunpack.c.l.bf16 %v36
      %v47 = vunpack.c.h.bf16 %v36
      %v48 = vunpack.c.l.bf16 %v37
      %v49 = vunpack.c.h.bf16 %v37
      %v50 = vunpack.c.l.bf16 %v38
      %v51 = vunpack.c.h.bf16 %v38
      %v52 = vunpack.c.l.bf16 %v39
      %v53 = vunpack.c.h.bf16 %v39
      %v54 = vunpack.c.l.bf16 %v40
      %v55 = vunpack.c.h.bf16 %v40
      %v56 = vunpack.c.l.bf16 %v41
      %v57 = vunpack.c.h.bf16 %v41
      %v58 = vmul.f32 %v42, %v42
      %v59 = vmul.f32 %v43, %v43
      %v60 = vmul.f32 %v44, %v44
      %v61 = vmul.f32 %v45, %v45
      %v62 = vmul.f32 %v46, %v46
      %v63 = vmul.f32 %v47, %v47
      %v64 = vmul.f32 %v48, %v48
      %v65 = vmul.f32 %v49, %v49
      %v66 = vmul.f32 %v50, %v50
      %v67 = vmul.f32 %v51, %v51
      %v68 = vmul.f32 %v52, %v52
      %v69 = vmul.f32 %v53, %v53
      %v70 = vmul.f32 %v54, %v54
      %v71 = vmul.f32 %v55, %v55
      %v72 = vmul.f32 %v56, %v56
      %v73 = vmul.f32 %v57, %v57
      %v74 = vadd.f32 %v58, %v62
      %v75 = vadd.f32 %v74, %v66
      %v76 = vadd.f32 %v75, %v70
      %v77 = vrot.slane %v76, 4
      %v78 = vadd.f32 %v76, %v77
      %v79 = vrot.slane %v78, 2
      %v80 = vadd.f32 %v78, %v79
      %v81 = vrot.slane %v80, 1
      %v82 = vadd.f32 %v80, %v81
      %v83 = vadd.f32 %v59, %v63
      %v84 = vadd.f32 %v83, %v67
      %v85 = vadd.f32 %v84, %v71
      %v86 = vrot.slane %v85, 4
      %v87 = vadd.f32 %v85, %v86
      %v88 = vrot.slane %v87, 2
      %v89 = vadd.f32 %v87, %v88
      %v90 = vrot.slane %v89, 1
      %v91 = vadd.f32 %v89, %v90
      %v92 = vadd.f32 %v60, %v64
      %v93 = vadd.f32 %v92, %v68
      %v94 = vadd.f32 %v93, %v72
      %v95 = vrot.slane %v94, 4
      %v96 = vadd.f32 %v94, %v95
      %v97 = vrot.slane %v96, 2
      %v98 = vadd.f32 %v96, %v97
      %v99 = vrot.slane %v98, 1
      %v100 = vadd.f32 %v98, %v99
      %v101 = vadd.f32 %v61, %v65
      %v102 = vadd.f32 %v101, %v69
      %v103 = vadd.f32 %v102, %v73
      %v104 = vrot.slane %v103, 4
      %v105 = vadd.f32 %v103, %v104
      %v106 = vrot.slane %v105, 2
      %v107 = vadd.f32 %v105, %v106
      %v108 = vrot.slane %v107, 1
      %v109 = vadd.f32 %v107, %v108
      %v110 = vadd.f32 %v82, 1e-30
      %v111 = vadd.f32 %v91, 1e-30
      %v112 = vadd.f32 %v100, 1e-30
      %v113 = vadd.f32 %v109, 1e-30
      %v114 = vrsqrt.pop %v110
      %v115 = vrsqrt.pop %v111
      %v116 = vrsqrt.pop %v112
      %v117 = vrsqrt.pop %v113
      %v122 = vcombine.low %v114, %v115
      %v123 = vcombine.low %v116, %v117
      %v125 = vunpack.c.l.s4 1966171168
      %v126 = vunpack.c.0.s8 %v125
      %v127 = vlaneseq
      %v128 = vshrl.u32 %v127, 7
      %v129 = vsub.s32 %v126, %v128
      %v130 = vrot.slane %v122, %v129
      %v132 = vunpack.c.l.s4 1966171168
      %v133 = vunpack.c.0.s8 %v132
      %v134 = vlaneseq
      %v135 = vshrl.u32 %v134, 7
      %v136 = vsub.s32 %v133, %v135
      %v137 = vrot.slane %v123, %v136
      %v138 = vcombine.low %v130, %v137
      %v140 = vunpack.c.l.s4 1966171168
      %v141 = vunpack.c.0.s8 %v140
      %v142 = vlaneseq
      %v143 = vshrl.u32 %v142, 7
      %v144 = vsub.s32 %v141, %v143
      %v145 = vrot.slane %v138, %v144
      %v147 = vlaneseq
      %vm148 = vcmp.ge.s32.totalorder %v147, 0
      %vm149 = vcmp.lt.s32.totalorder %v147, 512
      %vm150 = vmand %vm148, %vm149
      %151 = vst.msk [vmem:[#allocation2] sm:$0xf] %vm150, %v145
    $region21: #{tpu_custom_call.1} parent=1 // pred_fallthru
      _
    %s152 = smul.u32 0, 16
    %s153 = sshra.s32 %s152, 3
    %s154 = sand.u32 %s152, 7
    %s155 = smul.addr %s153, 4
    %s156 = scalar_lea.vmem %s0, %s155
    %v157 = vld [vmem:[%s156] sm:$0xf]
    %v158 = vld [vmem:[%s156 + $0x4] sm:$0xf]
    %s159 = scalar_lea.vmem %s2, %s152
    %v160 = vld [vmem:[%s159] sm:$0xff]
    %v161 = vld [vmem:[%s159 + $0x8] sm:$0xff]
    %v162 = vld [vmem:[#allocation3] sm:$0xff]
    %v163 = vld [vmem:[#allocation3 + $0x8] sm:$0xff]
    %v164 = vld [vmem:[#allocation3 + $0x10] sm:$0xff]
    %v165 = vld [vmem:[#allocation3 + $0x18] sm:$0xff]
    %v166 = vld [vmem:[#allocation3 + $0x20] sm:$0xff]
    %v167 = vld [vmem:[#allocation3 + $0x28] sm:$0xff]
    %v168 = vld [vmem:[#allocation3 + $0x30] sm:$0xff]
    %v169 = vld [vmem:[#allocation3 + $0x38] sm:$0xff]
    %v172 = vunpack.c.l.b16 %v157
    %v173 = vunpack.c.l.b16 %v158
    %v174 = vpack.c.b16 %v173, %v172
    %v183 = vunpack.c.l.b16 %v162
    %v184 = vunpack.c.h.b16 %v162
    %v185 = vunpack.c.l.b16 %v163
    %v186 = vunpack.c.h.b16 %v163
    %v187 = vunpack.c.l.b16 %v164
    %v188 = vunpack.c.h.b16 %v164
    %v189 = vunpack.c.l.b16 %v165
    %v190 = vunpack.c.h.b16 %v165
    %v191 = vunpack.c.l.b16 %v166
    %v192 = vunpack.c.h.b16 %v166
    %v193 = vunpack.c.l.b16 %v167
    %v194 = vunpack.c.h.b16 %v167
    %v195 = vunpack.c.l.b16 %v168
    %v196 = vunpack.c.h.b16 %v168
    %v197 = vunpack.c.l.b16 %v169
    %v198 = vunpack.c.h.b16 %v169
    %v199 = vpack.c.b16 %v187, %v183
    %v200 = vpack.c.b16 %v188, %v184
    %v201 = vpack.c.b16 %v189, %v185
    %v202 = vpack.c.b16 %v190, %v186
    %v203 = vpack.c.b16 %v195, %v191
    %v204 = vpack.c.b16 %v196, %v192
    %v205 = vpack.c.b16 %v197, %v193
    %v206 = vpack.c.b16 %v198, %v194
    %vm215 = vcmask 261120
    %v217 = vsel %vm215, %v174, 0
    %219 = vmatprep.subr.bf16.mxu0 0
    %220 = vmatpush1.bf16.msra.mxu0 0
    %221 = vmatprep.subr.bf16.mxu0 0
    %222 = vmatpush1.bf16.msra.mxu0 0
    %223 = vmatprep.subr.bf16.mxu0 0
    %224 = vmatpush1.bf16.msra.mxu0 0
    %225 = vmatprep.subr.bf16.mxu0 0
    %226 = vmatpush1.bf16.msra.mxu0 0
    %227 = vmatprep.subr.bf16.mxu0 0
    %228 = vmatpush1.bf16.msra.mxu0 0
    %229 = vmatprep.subr.bf16.mxu0 0
    %230 = vmatpush1.bf16.msra.mxu0 0
    %231 = vmatprep.subr.bf16.mxu0 %v204
    %232 = vmatpush1.bf16.msra.mxu0 %v203
    %233 = vmatprep.subr.bf16.mxu0 %v200
    %234 = vmatpush1.bf16.msra.mxu0 %v199
    %235 = vmatprep.subr.bf16.mxu0 0
    %236 = vmatpush2.bf16.msra.mxu0 0
    %237 = vmatprep.subr.bf16.mxu0 0
    %238 = vmatpush2.bf16.msra.mxu0 0
    %239 = vmatprep.subr.bf16.mxu0 0
    %240 = vmatpush2.bf16.msra.mxu0 0
    %241 = vmatprep.subr.bf16.mxu0 0
    %242 = vmatpush2.bf16.msra.mxu0 0
    %243 = vmatprep.subr.bf16.mxu0 0
    %244 = vmatpush2.bf16.msra.mxu0 0
    %245 = vmatprep.subr.bf16.mxu0 0
    %246 = vmatpush2.bf16.msra.mxu0 0
    %247 = vmatprep.subr.bf16.mxu0 0
    %248 = vmatpush2.bf16.msra.mxu0 0
    %249 = vmatprep.subr.bf16.mxu0 0
    %250 = vmatpush2.bf16.msra.mxu0 0
    %251 = vmatprep.mubr.bf16.mxu0 0
    %252 = vmatmul.mubr.bf16.gmra.mxu0 %v217
    %v253 = vpop.f32.mrf.mxu0
    %v254 = vadd.f32 0.0, %v253
    %v255 = vpop.f32.mrf.mxu0
    %v256 = vadd.f32 0.0, %v255
    %v257 = vpop.f32.mrf.mxu0
    %v258 = vadd.f32 0.0, %v257
    %v259 = vpop.f32.mrf.mxu0
    %v260 = vadd.f32 0.0, %v259
    %261 = vdwg.mxu0
    %262 = vmatprep.subr.bf16.mxu0 0
    %263 = vmatpush1.bf16.msra.mxu0 0
    %264 = vmatprep.subr.bf16.mxu0 0
    %265 = vmatpush1.bf16.msra.mxu0 0
    %266 = vmatprep.subr.bf16.mxu0 0
    %267 = vmatpush1.bf16.msra.mxu0 0
    %268 = vmatprep.subr.bf16.mxu0 0
    %269 = vmatpush1.bf16.msra.mxu0 0
    %270 = vmatprep.subr.bf16.mxu0 0
    %271 = vmatpush1.bf16.msra.mxu0 0
    %272 = vmatprep.subr.bf16.mxu0 0
    %273 = vmatpush1.bf16.msra.mxu0 0
    %274 = vmatprep.subr.bf16.mxu0 %v206
    %275 = vmatpush1.bf16.msra.mxu0 %v205
    %276 = vmatprep.subr.bf16.mxu0 %v202
    %277 = vmatpush1.bf16.msra.mxu0 %v201
    %278 = vmatprep.subr.bf16.mxu0 0
    %279 = vmatpush2.bf16.msra.mxu0 0
    %280 = vmatprep.subr.bf16.mxu0 0
    %281 = vmatpush2.bf16.msra.mxu0 0
    %282 = vmatprep.subr.bf16.mxu0 0
    %283 = vmatpush2.bf16.msra.mxu0 0
    %284 = vmatprep.subr.bf16.mxu0 0
    %285 = vmatpush2.bf16.msra.mxu0 0
    %286 = vmatprep.subr.bf16.mxu0 0
    %287 = vmatpush2.bf16.msra.mxu0 0
    %288 = vmatprep.subr.bf16.mxu0 0
    %289 = vmatpush2.bf16.msra.mxu0 0
    %290 = vmatprep.subr.bf16.mxu0 0
    %291 = vmatpush2.bf16.msra.mxu0 0
    %292 = vmatprep.subr.bf16.mxu0 0
    %293 = vmatpush2.bf16.msra.mxu0 0
    %294 = vmatprep.mubr.bf16.mxu0 0
    %295 = vmatmul.mubr.bf16.gmra.mxu0 %v217
    %v296 = vpop.f32.mrf.mxu0
    %v297 = vadd.f32 0.0, %v296
    %v298 = vpop.f32.mrf.mxu0
    %v299 = vadd.f32 0.0, %v298
    %v300 = vpop.f32.mrf.mxu0
    %v301 = vadd.f32 0.0, %v300
    %v302 = vpop.f32.mrf.mxu0
    %v303 = vadd.f32 0.0, %v302
    %304 = vdwg.mxu0
    %v305 = vld [vmem:[#allocation2] sm:$0xf]
    %v307 = vlaneseq
    %v308 = vshrl.u32 %v307, 7
    %v309 = vsub.s32 0, %v308
    %v310 = vrot.slane %v305, %v309
    %v311 = vlaneseq
    %v312 = vshrl.u32 %v311, 7
    %v313 = vsub.s32 1, %v312
    %v314 = vrot.slane %v305, %v313
    %v315 = vlaneseq
    %v316 = vshrl.u32 %v315, 7
    %v317 = vsub.s32 2, %v316
    %v318 = vrot.slane %v305, %v317
    %v319 = vlaneseq
    %v320 = vshrl.u32 %v319, 7
    %v321 = vsub.s32 3, %v320
    %v322 = vrot.slane %v305, %v321
    %v327 = vmul.f32 %v254, %v310
    %v328 = vmul.f32 %v256, %v314
    %v329 = vmul.f32 %v297, %v318
    %v330 = vmul.f32 %v299, %v322
    %v331 = vmul.f32 %v258, %v310
    %v332 = vmul.f32 %v260, %v314
    %v333 = vmul.f32 %v301, %v318
    %v334 = vmul.f32 %v303, %v322
    %v335 = vmax.f32 %v327, -0.9999
    %v336 = vmax.f32 %v328, -0.9999
    %v337 = vmax.f32 %v329, -0.9999
    %v338 = vmax.f32 %v330, -0.9999
    %v339 = vmax.f32 %v331, -0.9999
    %v340 = vmax.f32 %v332, -0.9999
    %v341 = vmax.f32 %v333, -0.9999
    %v342 = vmax.f32 %v334, -0.9999
    %v343 = vmin.f32 %v335, 0.9999
    %v344 = vmin.f32 %v336, 0.9999
    %v345 = vmin.f32 %v337, 0.9999
    %v346 = vmin.f32 %v338, 0.9999
    %v347 = vmin.f32 %v339, 0.9999
    %v348 = vmin.f32 %v340, 0.9999
    %v349 = vmin.f32 %v341, 0.9999
    %v350 = vmin.f32 %v342, 0.9999
    %s351 = smul.u32 0, 512
    %v352 = vstv %s351
    %v353 = vsub.s32 %v160, %v352
    %v354 = vsub.s32 %v161, %v352
    %v355 = vlaneseq
    %v356 = vand.u32 %v355, 127
    %v357 = vadd.s32 %v356, 128
    %v358 = vadd.s32 %v356, 256
    %v359 = vadd.s32 %v356, 384
    %360 = vset.pattern.permute.xlu0 0
    %361 = vperm.xlu0 %360, %v353
    %v362 = vpop.permute.xlu0 %361
    %363 = vset.pattern.permute.xlu0 0
    %364 = vperm.xlu0 %363, %v354
    %v365 = vpop.permute.xlu0 %364
    %vm366 = vcmp.eq.s32.totalorder %v356, %v362
    %vm367 = vcmp.eq.s32.totalorder %v357, %v362
    %vm368 = vcmp.eq.s32.totalorder %v358, %v362
    %vm369 = vcmp.eq.s32.totalorder %v359, %v362
    %vm370 = vcmp.eq.s32.totalorder %v356, %v365
    %vm371 = vcmp.eq.s32.totalorder %v357, %v365
    %vm372 = vcmp.eq.s32.totalorder %v358, %v365
    %vm373 = vcmp.eq.s32.totalorder %v359, %v365
    %v374 = vmul.f32 %v343, %v343
    %v375 = vmul.f32 %v344, %v344
    %v376 = vmul.f32 %v345, %v345
    %v377 = vmul.f32 %v346, %v346
    %v378 = vmul.f32 %v347, %v347
    %v379 = vmul.f32 %v348, %v348
    %v380 = vmul.f32 %v349, %v349
    %v381 = vmul.f32 %v350, %v350
    %v382 = vsub.f32 1.0, %v374
    %v383 = vsub.f32 1.0, %v375
    %v384 = vsub.f32 1.0, %v376
    %v385 = vsub.f32 1.0, %v377
    %v386 = vsub.f32 1.0, %v378
    %v387 = vsub.f32 1.0, %v379
    %v388 = vsub.f32 1.0, %v380
    %v389 = vsub.f32 1.0, %v381
    %v390 = vrsqrt.pop %v382
    %v391 = vmul.f32 %v382, %v390
    %vm392 = vcmp.eq.f32.partialorder %v382, inf
    %v393 = vsel %vm392, %v382, %v391
    %vm394 = vcmp.eq.f32.partialorder %v382, 0.0
    %v395 = vand.u32 %v382, 2147483648
    %v396 = vsel %vm394, %v395, %v393
    %v397 = vrsqrt.pop %v383
    %v398 = vmul.f32 %v383, %v397
    %vm399 = vcmp.eq.f32.partialorder %v383, inf
    %v400 = vsel %vm399, %v383, %v398
    %vm401 = vcmp.eq.f32.partialorder %v383, 0.0
    %v402 = vand.u32 %v383, 2147483648
    %v403 = vsel %vm401, %v402, %v400
    %v404 = vrsqrt.pop %v384
    %v405 = vmul.f32 %v384, %v404
    %vm406 = vcmp.eq.f32.partialorder %v384, inf
    %v407 = vsel %vm406, %v384, %v405
    %vm408 = vcmp.eq.f32.partialorder %v384, 0.0
    %v409 = vand.u32 %v384, 2147483648
    %v410 = vsel %vm408, %v409, %v407
    %v411 = vrsqrt.pop %v385
    %v412 = vmul.f32 %v385, %v411
    %vm413 = vcmp.eq.f32.partialorder %v385, inf
    %v414 = vsel %vm413, %v385, %v412
    %vm415 = vcmp.eq.f32.partialorder %v385, 0.0
    %v416 = vand.u32 %v385, 2147483648
    %v417 = vsel %vm415, %v416, %v414
    %v418 = vrsqrt.pop %v386
    %v419 = vmul.f32 %v386, %v418
    %vm420 = vcmp.eq.f32.partialorder %v386, inf
    %v421 = vsel %vm420, %v386, %v419
    %vm422 = vcmp.eq.f32.partialorder %v386, 0.0
    %v423 = vand.u32 %v386, 2147483648
    %v424 = vsel %vm422, %v423, %v421
    %v425 = vrsqrt.pop %v387
    %v426 = vmul.f32 %v387, %v425
    %vm427 = vcmp.eq.f32.partialorder %v387, inf
    %v428 = vsel %vm427, %v387, %v426
    %vm429 = vcmp.eq.f32.partialorder %v387, 0.0
    %v430 = vand.u32 %v387, 2147483648
    %v431 = vsel %vm429, %v430, %v428
    %v432 = vrsqrt.pop %v388
    %v433 = vmul.f32 %v388, %v432
    %vm434 = vcmp.eq.f32.partialorder %v388, inf
    %v435 = vsel %vm434, %v388, %v433
    %vm436 = vcmp.eq.f32.partialorder %v388, 0.0
    %v437 = vand.u32 %v388, 2147483648
    %v438 = vsel %vm436, %v437, %v435
    %v439 = vrsqrt.pop %v389
    %v440 = vmul.f32 %v389, %v439
    %vm441 = vcmp.eq.f32.partialorder %v389, inf
    %v442 = vsel %vm441, %v389, %v440
    %vm443 = vcmp.eq.f32.partialorder %v389, 0.0
    %v444 = vand.u32 %v389, 2147483648
    %v445 = vsel %vm443, %v444, %v442
    %v446 = vmul.f32 %v343, 0.87758255
    %v447 = vmul.f32 %v344, 0.87758255
    %v448 = vmul.f32 %v345, 0.87758255
    %v449 = vmul.f32 %v346, 0.87758255
    %v450 = vmul.f32 %v347, 0.87758255
    %v451 = vmul.f32 %v348, 0.87758255
    %v452 = vmul.f32 %v349, 0.87758255
    %v453 = vmul.f32 %v350, 0.87758255
    %v454 = vmul.f32 %v396, 0.47942555
    %v455 = vmul.f32 %v403, 0.47942555
    %v456 = vmul.f32 %v410, 0.47942555
    %v457 = vmul.f32 %v417, 0.47942555
    %v458 = vmul.f32 %v424, 0.47942555
    %v459 = vmul.f32 %v431, 0.47942555
    %v460 = vmul.f32 %v438, 0.47942555
    %v461 = vmul.f32 %v445, 0.47942555
    %v462 = vsub.f32 %v446, %v454
    %v463 = vsub.f32 %v447, %v455
    %v464 = vsub.f32 %v448, %v456
    %v465 = vsub.f32 %v449, %v457
    %v466 = vsub.f32 %v450, %v458
    %v467 = vsub.f32 %v451, %v459
    %v468 = vsub.f32 %v452, %v460
    %v469 = vsub.f32 %v453, %v461
    %vm470 = vcmp.lt.f32.partialorder %v343, -0.8775346
    %vm471 = vcmp.lt.f32.partialorder %v344, -0.8775346
    %vm472 = vcmp.lt.f32.partialorder %v345, -0.8775346
    %vm473 = vcmp.lt.f32.partialorder %v346, -0.8775346
    %vm474 = vcmp.lt.f32.partialorder %v347, -0.8775346
    %vm475 = vcmp.lt.f32.partialorder %v348, -0.8775346
    %vm476 = vcmp.lt.f32.partialorder %v349, -0.8775346
    %vm477 = vcmp.lt.f32.partialorder %v350, -0.8775346
    %v478 = vsel %vm470, -1.0, %v462
    %v479 = vsel %vm471, -1.0, %v463
    %v480 = vsel %vm472, -1.0, %v464
    %v481 = vsel %vm473, -1.0, %v465
    %v482 = vsel %vm474, -1.0, %v466
    %v483 = vsel %vm475, -1.0, %v467
    %v484 = vsel %vm476, -1.0, %v468
    %v485 = vsel %vm477, -1.0, %v469
    %v486 = vsel %vm366, %v478, %v343
    %v487 = vsel %vm367, %v479, %v344
    %v488 = vsel %vm368, %v480, %v345
    %v489 = vsel %vm369, %v481, %v346
    %v490 = vsel %vm370, %v482, %v347
    %v491 = vsel %vm371, %v483, %v348
    %v492 = vsel %vm372, %v484, %v349
    %v493 = vsel %vm373, %v485, %v350
    %v494 = vmul.f32 %v486, 64.0
    %v495 = vmul.f32 %v487, 64.0
    %v496 = vmul.f32 %v488, 64.0
    %v497 = vmul.f32 %v489, 64.0
    %v498 = vmul.f32 %v490, 64.0
    %v499 = vmul.f32 %v491, 64.0
    %v500 = vmul.f32 %v492, 64.0
    %v501 = vmul.f32 %v493, 64.0
    %502 = vst [vmem:[#allocation6] sm:$0xff] %v494
    %503 = vst [vmem:[#allocation6 + $0x8] sm:$0xff] %v495
    %504 = vst [vmem:[#allocation6 + $0x10] sm:$0xff] %v496
    %505 = vst [vmem:[#allocation6 + $0x18] sm:$0xff] %v497
    %506 = vst [vmem:[#allocation6 + $0x20] sm:$0xff] %v498
    %507 = vst [vmem:[#allocation6 + $0x28] sm:$0xff] %v499
    %508 = vst [vmem:[#allocation6 + $0x30] sm:$0xff] %v500
    %509 = vst [vmem:[#allocation6 + $0x38] sm:$0xff] %v501
    // Predicated region
    $region22: #{tpu_custom_call.1} parent=1 // pred_check
      _
    $region23: #{tpu_custom_call.1} parent=1 // pred_check_branch
      %511 = sbr.rel (0) target = $region25
    $region24: #{tpu_custom_call.1} parent=1 // pred_region
      %s513 = ssub.s32 1024, 1024
      %514 = vsyncadd [#allocation5], %s513
      %s515 = sshll.u32 [#allocation6], 4
      %s516 = int_to_ptr.vmem [resolvable:$true] %s515
      %521 = dma.vmem_to_hbm [thread:$0]  %s516, 1024, %s3, [#allocation5], 512, 512, 32
    $region25: #{tpu_custom_call.1} parent=1 // pred_fallthru
      _
    // Predicated region
    $region26: #{tpu_custom_call.1} parent=1 // pred_check
      _
    $region27: #{tpu_custom_call.1} parent=1 // pred_check_branch
      %523 = sbr.rel (0) target = $region29
    $region28: #{tpu_custom_call.1} parent=1 // pred_region
      %524 = dma.done [#allocation5], 1024
    $region29: #{tpu_custom_call.1} parent=1 // pred_fallthru
      _
    %525 = vsyncpa [#allocation4], 1
    %526 = vsyncpa [#allocation5], 1

</llo_original>
